<compile_context>
chip_gen: v6e
topology: v6e:2x2x1
jax: 0.10.0
libtpu: 0.0.40
codegen_flags: <defaults>
</compile_context>

<pallas_src>
import jax
import jax.numpy as jnp
from jax import lax
from jax.experimental import pallas as pl
from jax.experimental.pallas import tpu as pltpu


def _round_up(a, m):
    return -(-a // m) * m


def mlp_kernel(x_ref, w1_ref, b1_ref, w2_ref, b2_ref, w3_ref, b3_ref,
               w4_ref, b4_ref, o_ref):
    """Fused 4-layer MLP. x arrives in natural (tile, D) layout; every intermediate and the
    output carry the batch along the lane (last) axis."""
    x = x_ref[...].astype(w1_ref.dtype)                       # (tile, D); cast on VPU, hidden
    # fc1: contract on D (last dim of BOTH operands) so batch lands on lanes of the result.
    h = lax.dot_general(w1_ref[...], x, (((1,), (1,)), ((), ())),
                        preferred_element_type=jnp.float32)    # (64, tile), f32 accumulation
    h = jnp.maximum(h + b1_ref[...], 0.0)
    # dropout1: identity in eval mode
    h = jnp.dot(w2_ref[...], h.astype(w2_ref.dtype),
                preferred_element_type=jnp.float32)            # (32, tile)
    h = jnp.maximum(h + b2_ref[...], 0.0)
    # dropout2: identity in eval mode
    h = jnp.dot(w3_ref[...], h.astype(w3_ref.dtype),
                preferred_element_type=jnp.float32)            # (16, tile)
    h = jnp.maximum(h + b3_ref[...], 0.0)
    # fc4 (16 -> 1): an N=1, K=16 matmul would waste a full MXU pass; VPU multiply + sublane
    # (XLU) reduction rides otherwise-idle slots and is already lane-dense.
    out = jnp.sum(h * w4_ref[...], axis=0, keepdims=True) + b4_ref[...]   # (1, tile), f32
    o_ref[...] = out.astype(o_ref.dtype)


MAX_BATCH_TILE = 4096      # lanes; multiple of 256 (MXU) and 128 (lane-aligned output blocks)
SINGLE_BLOCK_MAX = 512     # at/below this, run one block: per-launch overhead dominates anyway


def connect_four_heuristic_forward(x, params, *, compute_dtype=jnp.bfloat16,
                                    max_batch_tile=MAX_BATCH_TILE):
    """x: (B, input_dim). params: PyTorch-layout weights (out, in), biases (out,).

    Returns (B, 1) float32. Eval-mode semantics (dropout = identity).
    """
    B, D = x.shape
    assert max_batch_tile % 256 == 0, "tile cap must stay MXU/lane aligned"

    if B <= SINGLE_BLOCK_MAX:
        # Single lane-aligned block. Rounding to 128 (not 8) keeps the x-tile loads and the
        # (1, tile) output store full-width / unmasked; the padding lanes are free (the same
        # number of vregs is touched either way).
        batch_tile = _round_up(max(B, 1), 128)
        num_tiles = 1
    else:
        # EVEN number of grid steps (>= 2) so dimension_semantics=("parallel",) can shard the
        # grid across both v7x TensorCores; tiles are 256-aligned and capped at max_batch_tile
        # to amortize the ~0.35 us per-step overhead while keeping VMEM usage to a few MiB.
        num_tiles = 2 * (-(-B // (2 * max_batch_tile)))
        batch_tile = _round_up(-(-B // num_tiles), 256)
    b_pad = num_tiles * batch_tile

    # x is passed through untouched (natural layout, original dtype). The only wrapper copy is
    # a row pad, and only when B doesn't already fill the tile grid; the compute-dtype cast of
    # the matmul operand happens per-tile inside the kernel.
    if b_pad != B:
        x = jnp.pad(x, ((0, b_pad - B), (0, 0)))

    wdt = x.dtype if compute_dtype is None else compute_dtype
    # TODO(synk): D=42 is left ragged (Mosaic masks the K remainder); padding it to 48/64 would
    # reintroduce a full wrapper copy of x, which costs more than the few-% masked-K overhead.
    w1 = params["w1"].astype(wdt)                            # (64, D)
    w2 = params["w2"].astype(wdt)                            # (32, 64)
    w3 = params["w3"].astype(wdt)                            # (16, 32)
    w4 = params["w4"].reshape(-1, 1).astype(jnp.float32)     # (16, 1): stays f32 (VPU path)
    b1 = params["b1"].reshape(-1, 1).astype(jnp.float32)     # (64, 1)
    b2 = params["b2"].reshape(-1, 1).astype(jnp.float32)     # (32, 1)
    b3 = params["b3"].reshape(-1, 1).astype(jnp.float32)     # (16, 1)
    b4 = params["b4"].reshape(-1, 1).astype(jnp.float32)     # (1, 1)

    def const_spec(shape):
        # Whole-array block + constant index map: weights/biases are KBs and stay VMEM-resident
        # across every grid step (pipeline DMA is limited to the x tiles and the output tiles).
        return pl.BlockSpec(shape, lambda i: (0, 0))

    out = pl.pallas_call(
        mlp_kernel,
        out_shape=jax.ShapeDtypeStruct((1, b_pad), jnp.float32),
        grid_spec=pl.GridSpec(
            grid=(num_tiles,),
            in_specs=[
                pl.BlockSpec((batch_tile, D), lambda i: (i, 0)),   # x tile, natural layout
                const_spec(w1.shape), const_spec(b1.shape),
                const_spec(w2.shape), const_spec(b2.shape),
                const_spec(w3.shape), const_spec(b3.shape),
                const_spec(w4.shape), const_spec(b4.shape),
            ],
            out_specs=pl.BlockSpec((1, batch_tile), lambda i: (0, i)),  # lane-dense output
        ),
        compiler_params=pltpu.CompilerParams(
            dimension_semantics=("parallel",)),     # megacore sharding on v7x when grid >= 2
    )(x, w1, b1, w2, b2, w3, b3, w4, b4)

    return out[0, :B].reshape(B, 1)


def init_params(key, input_dim):
    """Deterministic synthetic init, PyTorch nn.Linear layout: W (out, in), b (out,)."""
    dims = [(input_dim, 64), (64, 32), (32, 16), (16, 1)]
    params = {}
    keys = jax.random.split(key, 2 * len(dims))
    for idx, (d_in, d_out) in enumerate(dims):
        kw, kb = keys[2 * idx], keys[2 * idx + 1]
        bound = 1.0 / jnp.sqrt(jnp.float32(d_in))
        params[f"w{idx + 1}"] = jax.random.uniform(
            kw, (d_out, d_in), jnp.float32, -bound, bound)
        params[f"b{idx + 1}"] = jax.random.uniform(
            kb, (d_out,), jnp.float32, -bound, bound)
    return params


def reference_forward(x, params):
    """Pure-JAX reference mirroring the PyTorch eval-mode forward."""
    h = jnp.maximum(x @ params["w1"].T + params["b1"], 0.0)
    h = jnp.maximum(h @ params["w2"].T + params["b2"], 0.0)
    h = jnp.maximum(h @ params["w3"].T + params["b3"], 0.0)
    return h @ params["w4"].T + params["b4"]


if __name__ == "__main__":
    key = jax.random.PRNGKey(0)
    k_params, k_x, k_x2 = jax.random.split(key, 3)

    input_dim = 42          # Connect Four board: 6 x 7 = 42 cells
    batch = 16

    params = init_params(k_params, input_dim)
    x = jax.random.normal(k_x, (batch, input_dim), jnp.float32)
    ref = reference_forward(x, params)

    # f32 path: exact eval-mode semantics check against the pure-JAX reference (single block).
    out_f32 = connect_four_heuristic_forward(x, params, compute_dtype=jnp.float32)
    out_f32 = jax.block_until_ready(out_f32)
    assert out_f32.shape == (batch, 1)
    assert jnp.allclose(out_f32, ref, atol=1e-4, rtol=1e-4), "f32 mismatch vs reference"

    # bf16 matmul-operand path (performance default): looser tolerance vs the f32 reference.
    out_bf16 = connect_four_heuristic_forward(x, params, compute_dtype=jnp.bfloat16)
    out_bf16 = jax.block_until_ready(out_bf16)
    assert out_bf16.shape == (batch, 1)
    assert jnp.allclose(out_bf16, ref, atol=5e-2, rtol=5e-2), "bf16 mismatch vs reference"

    # Multi-tile path (num_tiles = 2, ragged batch -> padded): exercises the grid pipeline,
    # the even tile split for v7x, and the batch-pad/slice plumbing.
    batch2 = 640
    x2 = jax.random.normal(k_x2, (batch2, input_dim), jnp.float32)
    ref2 = reference_forward(x2, params)
    out2 = connect_four_heuristic_forward(x2, params, compute_dtype=jnp.float32)
    out2 = jax.block_until_ready(out2)
    assert out2.shape == (batch2, 1)
    assert jnp.allclose(out2, ref2, atol=1e-4, rtol=1e-4), "multi-tile mismatch vs reference"

    print("KERNEL_OK")
</pallas_src>

<mosaic_0001>
module attributes {stable_mosaic.version = 11 : i64} {
  func.func @mlp_kernel(%arg0: i32, %arg1: memref<128x42xf32, #tpu.memory_space<vmem>>, %arg2: memref<64x42xf32, #tpu.memory_space<vmem>>, %arg3: memref<64x1xf32, #tpu.memory_space<vmem>>, %arg4: memref<32x64xf32, #tpu.memory_space<vmem>>, %arg5: memref<32x1xf32, #tpu.memory_space<vmem>>, %arg6: memref<16x32xf32, #tpu.memory_space<vmem>>, %arg7: memref<16x1xf32, #tpu.memory_space<vmem>>, %arg8: memref<16x1xf32, #tpu.memory_space<vmem>>, %arg9: memref<1x1xf32, #tpu.memory_space<vmem>>, %arg10: memref<1x128xf32, #tpu.memory_space<vmem>>) attributes {dimension_semantics = [#tpu.dimension_semantics<parallel>], iteration_bounds = array<i64: 1>, scalar_prefetch = 0 : i64, scratch_operands = 0 : i64, tpu.core_type = #tpu.core_type<tc>, window_params = [{transform_indices = @transform_0, window_bounds = array<i64: 128, 42>}, {pipeline_mode = #tpu.pipeline_mode<synchronous>, transform_indices = @transform_1, window_bounds = array<i64: 64, 42>}, {pipeline_mode = #tpu.pipeline_mode<synchronous>, transform_indices = @transform_2, window_bounds = array<i64: 64, 1>}, {pipeline_mode = #tpu.pipeline_mode<synchronous>, transform_indices = @transform_3, window_bounds = array<i64: 32, 64>}, {pipeline_mode = #tpu.pipeline_mode<synchronous>, transform_indices = @transform_4, window_bounds = array<i64: 32, 1>}, {pipeline_mode = #tpu.pipeline_mode<synchronous>, transform_indices = @transform_5, window_bounds = array<i64: 16, 32>}, {pipeline_mode = #tpu.pipeline_mode<synchronous>, transform_indices = @transform_6, window_bounds = array<i64: 16, 1>}, {pipeline_mode = #tpu.pipeline_mode<synchronous>, transform_indices = @transform_7, window_bounds = array<i64: 16, 1>}, {pipeline_mode = #tpu.pipeline_mode<synchronous>, transform_indices = @transform_8, window_bounds = array<i64: 1, 1>}, {transform_indices = @transform_9, window_bounds = array<i64: 1, 128>}]} {
    %c0 = arith.constant 0 : index
    %c0_0 = arith.constant 0 : index
    %0 = vector.load %arg1[%c0, %c0_0] : memref<128x42xf32, #tpu.memory_space<vmem>>, vector<128x42xf32>
    %c0_1 = arith.constant 0 : index
    %c0_2 = arith.constant 0 : index
    %1 = vector.load %arg2[%c0_1, %c0_2] : memref<64x42xf32, #tpu.memory_space<vmem>>, vector<64x42xf32>
    %cst = arith.constant dense<0.000000e+00> : vector<64x128xf32>
    %2 = tpu.matmul %1, %0, %cst {dimension_numbers = #tpu.dot_dimension_numbers<[1], [1], [0], [0], [0, 0, 1, 0], [], []>} : vector<64x42xf32>, vector<128x42xf32>, vector<64x128xf32> -> vector<64x128xf32>
    %c0_3 = arith.constant 0 : index
    %c0_4 = arith.constant 0 : index
    %3 = vector.load %arg3[%c0_3, %c0_4] : memref<64x1xf32, #tpu.memory_space<vmem>>, vector<64x1xf32>
    %4 = vector.broadcast %3 : vector<64x1xf32> to vector<64x128xf32>
    %5 = arith.addf %2, %4 : vector<64x128xf32>
    %cst_5 = arith.constant 0.000000e+00 : f32
    %6 = vector.broadcast %cst_5 : f32 to vector<64x128xf32>
    %7 = arith.maximumf %5, %6 : vector<64x128xf32>
    %c0_6 = arith.constant 0 : index
    %c0_7 = arith.constant 0 : index
    %8 = vector.load %arg4[%c0_6, %c0_7] : memref<32x64xf32, #tpu.memory_space<vmem>>, vector<32x64xf32>
    %cst_8 = arith.constant dense<0.000000e+00> : vector<32x128xf32>
    %9 = tpu.matmul %8, %7, %cst_8 {dimension_numbers = #tpu.dot_dimension_numbers<[1], [0], [0], [1], [0, 0, 1, 1], [], []>} : vector<32x64xf32>, vector<64x128xf32>, vector<32x128xf32> -> vector<32x128xf32>
    %c0_9 = arith.constant 0 : index
    %c0_10 = arith.constant 0 : index
    %10 = vector.load %arg5[%c0_9, %c0_10] : memref<32x1xf32, #tpu.memory_space<vmem>>, vector<32x1xf32>
    %11 = vector.broadcast %10 : vector<32x1xf32> to vector<32x128xf32>
    %12 = arith.addf %9, %11 : vector<32x128xf32>
    %cst_11 = arith.constant 0.000000e+00 : f32
    %13 = vector.broadcast %cst_11 : f32 to vector<32x128xf32>
    %14 = arith.maximumf %12, %13 : vector<32x128xf32>
    %c0_12 = arith.constant 0 : index
    %c0_13 = arith.constant 0 : index
    %15 = vector.load %arg6[%c0_12, %c0_13] : memref<16x32xf32, #tpu.memory_space<vmem>>, vector<16x32xf32>
    %cst_14 = arith.constant dense<0.000000e+00> : vector<16x128xf32>
    %16 = tpu.matmul %15, %14, %cst_14 {dimension_numbers = #tpu.dot_dimension_numbers<[1], [0], [0], [1], [0, 0, 1, 1], [], []>} : vector<16x32xf32>, vector<32x128xf32>, vector<16x128xf32> -> vector<16x128xf32>
    %c0_15 = arith.constant 0 : index
    %c0_16 = arith.constant 0 : index
    %17 = vector.load %arg7[%c0_15, %c0_16] : memref<16x1xf32, #tpu.memory_space<vmem>>, vector<16x1xf32>
    %18 = vector.broadcast %17 : vector<16x1xf32> to vector<16x128xf32>
    %19 = arith.addf %16, %18 : vector<16x128xf32>
    %cst_17 = arith.constant 0.000000e+00 : f32
    %20 = vector.broadcast %cst_17 : f32 to vector<16x128xf32>
    %21 = arith.maximumf %19, %20 : vector<16x128xf32>
    %c0_18 = arith.constant 0 : index
    %c0_19 = arith.constant 0 : index
    %22 = vector.load %arg8[%c0_18, %c0_19] : memref<16x1xf32, #tpu.memory_space<vmem>>, vector<16x1xf32>
    %23 = vector.broadcast %22 : vector<16x1xf32> to vector<16x128xf32>
    %24 = arith.mulf %21, %23 : vector<16x128xf32>
    %cst_20 = arith.constant dense<0.000000e+00> : vector<128xf32>
    %25 = vector.multi_reduction <add>, %24, %cst_20 [0] : vector<16x128xf32> to vector<128xf32>
    %26 = vector.shape_cast %25 : vector<128xf32> to vector<1x128xf32>
    %c0_21 = arith.constant 0 : index
    %c0_22 = arith.constant 0 : index
    %27 = vector.load %arg9[%c0_21, %c0_22] : memref<1x1xf32, #tpu.memory_space<vmem>>, vector<1x1xf32>
    %28 = vector.broadcast %27 : vector<1x1xf32> to vector<1x128xf32>
    %29 = arith.addf %26, %28 : vector<1x128xf32>
    %c0_23 = arith.constant 0 : index
    %c0_24 = arith.constant 0 : index
    %30 = vector.load %arg10[%c0_23, %c0_24] : memref<1x128xf32, #tpu.memory_space<vmem>>, vector<1x128xf32>
    tpu.vector_store %arg10[%c0_23, %c0_24], %29 {strides = array<i32>} : memref<1x128xf32, #tpu.memory_space<vmem>>, vector<1x128xf32>,
    return
  }
  func.func @transform_0(%arg0: i32) -> (i32, i32) {
    %c0_i32 = arith.constant 0 : i32
    %c0_i32_0 = arith.constant 0 : i32
    return %arg0, %c0_i32 : i32, i32
  }
  func.func @transform_1(%arg0: i32) -> (i32, i32) {
    %c0_i32 = arith.constant 0 : i32
    %c0_i32_0 = arith.constant 0 : i32
    %c0_i32_1 = arith.constant 0 : i32
    return %c0_i32, %c0_i32_0 : i32, i32
  }
  func.func @transform_2(%arg0: i32) -> (i32, i32) {
    %c0_i32 = arith.constant 0 : i32
    %c0_i32_0 = arith.constant 0 : i32
    %c0_i32_1 = arith.constant 0 : i32
    return %c0_i32, %c0_i32_0 : i32, i32
  }
  func.func @transform_3(%arg0: i32) -> (i32, i32) {
    %c0_i32 = arith.constant 0 : i32
    %c0_i32_0 = arith.constant 0 : i32
    %c0_i32_1 = arith.constant 0 : i32
    return %c0_i32, %c0_i32_0 : i32, i32
  }
  func.func @transform_4(%arg0: i32) -> (i32, i32) {
    %c0_i32 = arith.constant 0 : i32
    %c0_i32_0 = arith.constant 0 : i32
    %c0_i32_1 = arith.constant 0 : i32
    return %c0_i32, %c0_i32_0 : i32, i32
  }
  func.func @transform_5(%arg0: i32) -> (i32, i32) {
    %c0_i32 = arith.constant 0 : i32
    %c0_i32_0 = arith.constant 0 : i32
    %c0_i32_1 = arith.constant 0 : i32
    return %c0_i32, %c0_i32_0 : i32, i32
  }
  func.func @transform_6(%arg0: i32) -> (i32, i32) {
    %c0_i32 = arith.constant 0 : i32
    %c0_i32_0 = arith.constant 0 : i32
    %c0_i32_1 = arith.constant 0 : i32
    return %c0_i32, %c0_i32_0 : i32, i32
  }
  func.func @transform_7(%arg0: i32) -> (i32, i32) {
    %c0_i32 = arith.constant 0 : i32
    %c0_i32_0 = arith.constant 0 : i32
    %c0_i32_1 = arith.constant 0 : i32
    return %c0_i32, %c0_i32_0 : i32, i32
  }
  func.func @transform_8(%arg0: i32) -> (i32, i32) {
    %c0_i32 = arith.constant 0 : i32
    %c0_i32_0 = arith.constant 0 : i32
    %c0_i32_1 = arith.constant 0 : i32
    return %c0_i32, %c0_i32_0 : i32, i32
  }
  func.func @transform_9(%arg0: i32) -> (i32, i32) {
    %c0_i32 = arith.constant 0 : i32
    %c0_i32_0 = arith.constant 0 : i32
    return %c0_i32, %arg0 : i32, i32
  }
}

</mosaic_0001>

<llo_original>
// kernel: tpu_custom_call.1
$region0: #{tpu_custom_call.1}
  #allocation0 [shape = 'u32[]', space=smem, size = 0x4, offset = 0x4, fixed_abs, tag = 'smem constant byte address 0x4 - core index']
  #allocation1 [shape = 'u32[144,128]{1,0:T(1,128)}', space=vmem, size = 0x12000, scoped, tag = 'internal scratch']
  #allocation2 [shape = 'f32[1,1]{1,0:T(1,128)S(1)}', space=vmem, size = 0x200, scoped, tag = 'scoped memory for tpu_custom_call.1']
  %s0 = inlined_call_operand.vmem [shape: f32[128,42], index: 0, kind: input, shape index: {}]
  %s1 = inlined_call_operand.vmem [shape: f32[64,42], index: 1, kind: input, shape index: {}]
  %s2 = inlined_call_operand.vmem [shape: f32[64,1], index: 2, kind: input, shape index: {}]
  %s3 = inlined_call_operand.vmem [shape: f32[32,64], index: 3, kind: input, shape index: {}]
  %s4 = inlined_call_operand.vmem [shape: f32[32,1], index: 4, kind: input, shape index: {}]
  %s5 = inlined_call_operand.vmem [shape: f32[16,32], index: 5, kind: input, shape index: {}]
  %s6 = inlined_call_operand.vmem [shape: f32[16,1], index: 6, kind: input, shape index: {}]
  %s7 = inlined_call_operand.vmem [shape: f32[16,1], index: 7, kind: input, shape index: {}]
  %s8 = inlined_call_operand.<no memory space> [shape: f32[1,1], index: 8, kind: input, shape index: {}]
  %s9 = inlined_call_operand.hbm [shape: f32[1,128], index: 9, kind: output, shape index: {}]
  %s10 = sld [smem:[#allocation0]]
  $region46: #{tpu_custom_call.1} parent=0
    _
  %s12 = ssub.s32 1, %s10
  %s13 = scalar_select 0, %s12, %s10
  %v14 = vstv %s8
  %15 = vst [vmem:[#allocation2] sm:$0x1] %v14
  $region1: #{tpu_custom_call.1} parent=0
    #allocation3 [shape = 'u8[512]{0}', space=vmem, size = 0x400, scoped, tag = 'output window, operand 0, single buffered']
    #allocation4 [shape = 's32[1]{0}', space=sflag, size = 0x4, scoped, tag = 'scoped memory for tpu_custom_call.1']
    %16 = vsyncpa [#allocation4], 0
    // Predicated region
    $region2: #{tpu_custom_call.1} parent=1 // pred_check
      _
    $region3: #{tpu_custom_call.1} parent=1 // pred_check_branch
      %18 = sbr.rel (0) target = $region5
    $region4: #{tpu_custom_call.1} parent=1 // pred_region
      _
    $region5: #{tpu_custom_call.1} parent=1 // pred_fallthru
      _
    // Predicated region
    $region6: #{tpu_custom_call.1} parent=1 // pred_check
      _
    $region7: #{tpu_custom_call.1} parent=1 // pred_check_branch
      %20 = sbr.rel (0) target = $region9
    $region8: #{tpu_custom_call.1} parent=1 // pred_region
      _
    $region9: #{tpu_custom_call.1} parent=1 // pred_fallthru
      _
    // Predicated region
    $region10: #{tpu_custom_call.1} parent=1 // pred_check
      _
    $region11: #{tpu_custom_call.1} parent=1 // pred_check_branch
      %22 = sbr.rel (0) target = $region13
    $region12: #{tpu_custom_call.1} parent=1 // pred_region
      _
    $region13: #{tpu_custom_call.1} parent=1 // pred_fallthru
      _
    // Predicated region
    $region14: #{tpu_custom_call.1} parent=1 // pred_check
      _
    $region15: #{tpu_custom_call.1} parent=1 // pred_check_branch
      %24 = sbr.rel (0) target = $region17
    $region16: #{tpu_custom_call.1} parent=1 // pred_region
      _
    $region17: #{tpu_custom_call.1} parent=1 // pred_fallthru
      _
    // Predicated region
    $region18: #{tpu_custom_call.1} parent=1 // pred_check
      _
    $region19: #{tpu_custom_call.1} parent=1 // pred_check_branch
      %26 = sbr.rel (0) target = $region21
    $region20: #{tpu_custom_call.1} parent=1 // pred_region
      _
    $region21: #{tpu_custom_call.1} parent=1 // pred_fallthru
      _
    // Predicated region
    $region22: #{tpu_custom_call.1} parent=1 // pred_check
      _
    $region23: #{tpu_custom_call.1} parent=1 // pred_check_branch
      %28 = sbr.rel (0) target = $region25
    $region24: #{tpu_custom_call.1} parent=1 // pred_region
      _
    $region25: #{tpu_custom_call.1} parent=1 // pred_fallthru
      _
    // Predicated region
    $region26: #{tpu_custom_call.1} parent=1 // pred_check
      _
    $region27: #{tpu_custom_call.1} parent=1 // pred_check_branch
      %30 = sbr.rel (0) target = $region29
    $region28: #{tpu_custom_call.1} parent=1 // pred_region
      _
    $region29: #{tpu_custom_call.1} parent=1 // pred_fallthru
      _
    // Predicated region
    $region30: #{tpu_custom_call.1} parent=1 // pred_check
      _
    $region31: #{tpu_custom_call.1} parent=1 // pred_check_branch
      %32 = sbr.rel (0) target = $region33
    $region32: #{tpu_custom_call.1} parent=1 // pred_region
      _
    $region33: #{tpu_custom_call.1} parent=1 // pred_fallthru
      _
    // Predicated region
    $region34: #{tpu_custom_call.1} parent=1 // pred_check
      _
    $region35: #{tpu_custom_call.1} parent=1 // pred_check_branch
      %34 = sbr.rel (0) target = $region37
    $region36: #{tpu_custom_call.1} parent=1 // pred_region
      _
    $region37: #{tpu_custom_call.1} parent=1 // pred_fallthru
      _
    %v35 = vld [vmem:[%s0] sm:$0xff]
    %v36 = vld [vmem:[%s0 + $0x8] sm:$0xff]
    %v37 = vld [vmem:[%s0 + $0x10] sm:$0xff]
    %v38 = vld [vmem:[%s0 + $0x18] sm:$0xff]
    %v39 = vld [vmem:[%s0 + $0x20] sm:$0xff]
    %v40 = vld [vmem:[%s0 + $0x28] sm:$0xff]
    %v41 = vld [vmem:[%s0 + $0x30] sm:$0xff]
    %v42 = vld [vmem:[%s0 + $0x38] sm:$0xff]
    %v43 = vld [vmem:[%s0 + $0x40] sm:$0xff]
    %v44 = vld [vmem:[%s0 + $0x48] sm:$0xff]
    %v45 = vld [vmem:[%s0 + $0x50] sm:$0xff]
    %v46 = vld [vmem:[%s0 + $0x58] sm:$0xff]
    %v47 = vld [vmem:[%s0 + $0x60] sm:$0xff]
    %v48 = vld [vmem:[%s0 + $0x68] sm:$0xff]
    %v49 = vld [vmem:[%s0 + $0x70] sm:$0xff]
    %v50 = vld [vmem:[%s0 + $0x78] sm:$0xff]
    %v51 = vld [vmem:[%s1] sm:$0xff]
    %v52 = vld [vmem:[%s1 + $0x8] sm:$0xff]
    %v53 = vld [vmem:[%s1 + $0x10] sm:$0xff]
    %v54 = vld [vmem:[%s1 + $0x18] sm:$0xff]
    %v55 = vld [vmem:[%s1 + $0x20] sm:$0xff]
    %v56 = vld [vmem:[%s1 + $0x28] sm:$0xff]
    %v57 = vld [vmem:[%s1 + $0x30] sm:$0xff]
    %v58 = vld [vmem:[%s1 + $0x38] sm:$0xff]
    %v59 = vld [vmem:[%s2] sm:$0xff]
    %v60 = vld [vmem:[%s2 + $0x8] sm:$0xff]
    %v61 = vld [vmem:[%s2 + $0x10] sm:$0xff]
    %v62 = vld [vmem:[%s2 + $0x18] sm:$0xff]
    %v63 = vld [vmem:[%s2 + $0x20] sm:$0xff]
    %v64 = vld [vmem:[%s2 + $0x28] sm:$0xff]
    %v65 = vld [vmem:[%s2 + $0x30] sm:$0xff]
    %v66 = vld [vmem:[%s2 + $0x38] sm:$0xff]
    %68 = vset.pattern.permute.xlu0 0
    %69 = vperm.xlu0 %68, %v59
    %v70 = vpop.permute.xlu0 %69
    %73 = vset.pattern.permute.xlu0 0
    %74 = vperm.xlu0 %73, %v60
    %v75 = vpop.permute.xlu0 %74
    %78 = vset.pattern.permute.xlu0 0
    %79 = vperm.xlu0 %78, %v61
    %v80 = vpop.permute.xlu0 %79
    %83 = vset.pattern.permute.xlu0 0
    %84 = vperm.xlu0 %83, %v62
    %v85 = vpop.permute.xlu0 %84
    %88 = vset.pattern.permute.xlu0 0
    %89 = vperm.xlu0 %88, %v63
    %v90 = vpop.permute.xlu0 %89
    %93 = vset.pattern.permute.xlu0 0
    %94 = vperm.xlu0 %93, %v64
    %v95 = vpop.permute.xlu0 %94
    %98 = vset.pattern.permute.xlu0 0
    %99 = vperm.xlu0 %98, %v65
    %v100 = vpop.permute.xlu0 %99
    %103 = vset.pattern.permute.xlu0 0
    %104 = vperm.xlu0 %103, %v66
    %v105 = vpop.permute.xlu0 %104
    %vm107 = vcmask 343040
    %v109 = vsel %vm107, %v51, 0
    %v112 = vsel %vm107, %v52, 0
    %v115 = vsel %vm107, %v53, 0
    %v118 = vsel %vm107, %v54, 0
    %v121 = vsel %vm107, %v55, 0
    %v124 = vsel %vm107, %v56, 0
    %v127 = vsel %vm107, %v57, 0
    %v130 = vsel %vm107, %v58, 0
    %v133 = vsel %vm107, %v35, 0
    %v136 = vsel %vm107, %v36, 0
    %v139 = vsel %vm107, %v37, 0
    %v142 = vsel %vm107, %v38, 0
    %v145 = vsel %vm107, %v39, 0
    %v148 = vsel %vm107, %v40, 0
    %v151 = vsel %vm107, %v41, 0
    %v154 = vsel %vm107, %v42, 0
    %v157 = vsel %vm107, %v43, 0
    %v160 = vsel %vm107, %v44, 0
    %v163 = vsel %vm107, %v45, 0
    %v166 = vsel %vm107, %v46, 0
    %v169 = vsel %vm107, %v47, 0
    %v172 = vsel %vm107, %v48, 0
    %v175 = vsel %vm107, %v49, 0
    %v178 = vsel %vm107, %v50, 0
    %180 = vmatprep.subr.mxu0 0.0
    %181 = vmatpush1.xpose.msra.mxu0 %v178
    %182 = vmatprep.subr.mxu0 0.0
    %183 = vmatpush1.xpose.msra.mxu0 %v175
    %184 = vmatprep.subr.mxu0 0.0
    %185 = vmatpush1.xpose.msra.mxu0 %v172
    %186 = vmatprep.subr.mxu0 0.0
    %187 = vmatpush1.xpose.msra.mxu0 %v169
    %188 = vmatprep.subr.mxu0 0.0
    %189 = vmatpush1.xpose.msra.mxu0 %v166
    %190 = vmatprep.subr.mxu0 0.0
    %191 = vmatpush1.xpose.msra.mxu0 %v163
    %192 = vmatprep.subr.mxu0 0.0
    %193 = vmatpush1.xpose.msra.mxu0 %v160
    %194 = vmatprep.subr.mxu0 0.0
    %195 = vmatpush1.xpose.msra.mxu0 %v157
    %196 = vmatprep.subr.mxu0 0.0
    %197 = vmatpush1.xpose.msra.mxu0 %v154
    %198 = vmatprep.subr.mxu0 0.0
    %199 = vmatpush1.xpose.msra.mxu0 %v151
    %200 = vmatprep.subr.mxu0 0.0
    %201 = vmatpush1.xpose.msra.mxu0 %v148
    %202 = vmatprep.subr.mxu0 0.0
    %203 = vmatpush1.xpose.msra.mxu0 %v145
    %204 = vmatprep.subr.mxu0 0.0
    %205 = vmatpush1.xpose.msra.mxu0 %v142
    %206 = vmatprep.subr.mxu0 0.0
    %207 = vmatpush1.xpose.msra.mxu0 %v139
    %208 = vmatprep.subr.mxu0 0.0
    %209 = vmatpush1.xpose.msra.mxu0 %v136
    %210 = vmatprep.subr.mxu0 0.0
    %211 = vmatpush1.xpose.msra.mxu0 %v133
    %212 = vmatprep.subr.mxu0 0.0
    %213 = vmatpush2.xpose.msra.mxu0 0.0
    %214 = vmatprep.subr.mxu0 0.0
    %215 = vmatpush2.xpose.msra.mxu0 0.0
    %216 = vmatprep.subr.mxu0 0.0
    %217 = vmatpush2.xpose.msra.mxu0 0.0
    %218 = vmatprep.subr.mxu0 0.0
    %219 = vmatpush2.xpose.msra.mxu0 0.0
    %220 = vmatprep.subr.mxu0 0.0
    %221 = vmatpush2.xpose.msra.mxu0 0.0
    %222 = vmatprep.subr.mxu0 0.0
    %223 = vmatpush2.xpose.msra.mxu0 0.0
    %224 = vmatprep.subr.mxu0 0.0
    %225 = vmatpush2.xpose.msra.mxu0 0.0
    %226 = vmatprep.subr.mxu0 0.0
    %227 = vmatpush2.xpose.msra.mxu0 0.0
    %228 = vmatprep.subr.mxu0 0.0
    %229 = vmatpush2.xpose.msra.mxu0 0.0
    %230 = vmatprep.subr.mxu0 0.0
    %231 = vmatpush2.xpose.msra.mxu0 0.0
    %232 = vmatprep.subr.mxu0 0.0
    %233 = vmatpush2.xpose.msra.mxu0 0.0
    %234 = vmatprep.subr.mxu0 0.0
    %235 = vmatpush2.xpose.msra.mxu0 0.0
    %236 = vmatprep.subr.mxu0 0.0
    %237 = vmatpush2.xpose.msra.mxu0 0.0
    %238 = vmatprep.subr.mxu0 0.0
    %239 = vmatpush2.xpose.msra.mxu0 0.0
    %240 = vmatprep.subr.mxu0 0.0
    %241 = vmatpush2.xpose.msra.mxu0 0.0
    %242 = vmatprep.subr.mxu0 0.0
    %243 = vmatpush2.xpose.msra.mxu0 0.0
    %244 = vmatprep.mubr.f32.mxu0 0.0
    %245 = vmatmul.mubr.f32.gmra.mxu0 %v109
    %v246 = vpop.f32.mrf.mxu0
    %v247 = vadd.f32 %v70, %v246
    %v248 = vpop.f32.mrf.mxu0
    %249 = vmatprep.mubr.f32.mxu0 0.0
    %250 = vmatmul.mubr.f32.gmra.mxu0 %v112
    %v251 = vpop.f32.mrf.mxu0
    %v252 = vadd.f32 %v75, %v251
    %v253 = vpop.f32.mrf.mxu0
    %254 = vmatprep.mubr.f32.mxu0 0.0
    %255 = vmatmul.mubr.f32.gmra.mxu0 %v115
    %v256 = vpop.f32.mrf.mxu0
    %v257 = vadd.f32 %v80, %v256
    %v258 = vpop.f32.mrf.mxu0
    %259 = vmatprep.mubr.f32.mxu0 0.0
    %260 = vmatmul.mubr.f32.gmra.mxu0 %v118
    %v261 = vpop.f32.mrf.mxu0
    %v262 = vadd.f32 %v85, %v261
    %v263 = vpop.f32.mrf.mxu0
    %264 = vmatprep.mubr.f32.mxu0 0.0
    %265 = vmatmul.mubr.f32.gmra.mxu0 %v121
    %v266 = vpop.f32.mrf.mxu0
    %v267 = vadd.f32 %v90, %v266
    %v268 = vpop.f32.mrf.mxu0
    %269 = vmatprep.mubr.f32.mxu0 0.0
    %270 = vmatmul.mubr.f32.gmra.mxu0 %v124
    %v271 = vpop.f32.mrf.mxu0
    %v272 = vadd.f32 %v95, %v271
    %v273 = vpop.f32.mrf.mxu0
    %274 = vmatprep.mubr.f32.mxu0 0.0
    %275 = vmatmul.mubr.f32.gmra.mxu0 %v127
    %v276 = vpop.f32.mrf.mxu0
    %v277 = vadd.f32 %v100, %v276
    %v278 = vpop.f32.mrf.mxu0
    %279 = vmatprep.mubr.f32.mxu0 0.0
    %280 = vmatmul.mubr.f32.gmra.mxu0 %v130
    %v281 = vpop.f32.mrf.mxu0
    %v282 = vadd.f32 %v105, %v281
    %v283 = vpop.f32.mrf.mxu0
    %284 = vdwg.mxu0
    %v285 = vmax.f32 %v247, 0.0
    %v286 = vmax.f32 %v252, 0.0
    %v287 = vmax.f32 %v257, 0.0
    %v288 = vmax.f32 %v262, 0.0
    %v289 = vmax.f32 %v267, 0.0
    %v290 = vmax.f32 %v272, 0.0
    %v291 = vmax.f32 %v277, 0.0
    %v292 = vmax.f32 %v282, 0.0
    %v293 = vld [vmem:[%s3] sm:$0xff]
    %v294 = vld [vmem:[%s3 + $0x8] sm:$0xff]
    %v295 = vld [vmem:[%s3 + $0x10] sm:$0xff]
    %v296 = vld [vmem:[%s3 + $0x18] sm:$0xff]
    %v297 = vld [vmem:[%s4] sm:$0xff]
    %v298 = vld [vmem:[%s4 + $0x8] sm:$0xff]
    %v299 = vld [vmem:[%s4 + $0x10] sm:$0xff]
    %v300 = vld [vmem:[%s4 + $0x18] sm:$0xff]
    %302 = vset.pattern.permute.xlu0 0
    %303 = vperm.xlu0 %302, %v297
    %v304 = vpop.permute.xlu0 %303
    %307 = vset.pattern.permute.xlu0 0
    %308 = vperm.xlu0 %307, %v298
    %v309 = vpop.permute.xlu0 %308
    %312 = vset.pattern.permute.xlu0 0
    %313 = vperm.xlu0 %312, %v299
    %v314 = vpop.permute.xlu0 %313
    %317 = vset.pattern.permute.xlu0 0
    %318 = vperm.xlu0 %317, %v300
    %v319 = vpop.permute.xlu0 %318
    %vm321 = vcmask 523264
    %v323 = vsel %vm321, %v293, 0
    %v326 = vsel %vm321, %v294, 0
    %v329 = vsel %vm321, %v295, 0
    %v332 = vsel %vm321, %v296, 0
    %334 = vmatprep.subr.mxu0 0.0
    %335 = vmatpush1.msra.mxu0 0.0
    %336 = vmatprep.subr.mxu0 0.0
    %337 = vmatpush1.msra.mxu0 0.0
    %338 = vmatprep.subr.mxu0 0.0
    %339 = vmatpush1.msra.mxu0 0.0
    %340 = vmatprep.subr.mxu0 0.0
    %341 = vmatpush1.msra.mxu0 0.0
    %342 = vmatprep.subr.mxu0 0.0
    %343 = vmatpush1.msra.mxu0 0.0
    %344 = vmatprep.subr.mxu0 0.0
    %345 = vmatpush1.msra.mxu0 0.0
    %346 = vmatprep.subr.mxu0 0.0
    %347 = vmatpush1.msra.mxu0 0.0
    %348 = vmatprep.subr.mxu0 0.0
    %349 = vmatpush1.msra.mxu0 0.0
    %350 = vmatprep.subr.mxu0 0.0
    %351 = vmatpush1.msra.mxu0 %v292
    %352 = vmatprep.subr.mxu0 0.0
    %353 = vmatpush1.msra.mxu0 %v291
    %354 = vmatprep.subr.mxu0 0.0
    %355 = vmatpush1.msra.mxu0 %v290
    %356 = vmatprep.subr.mxu0 0.0
    %357 = vmatpush1.msra.mxu0 %v289
    %358 = vmatprep.subr.mxu0 0.0
    %359 = vmatpush1.msra.mxu0 %v288
    %360 = vmatprep.subr.mxu0 0.0
    %361 = vmatpush1.msra.mxu0 %v287
    %362 = vmatprep.subr.mxu0 0.0
    %363 = vmatpush1.msra.mxu0 %v286
    %364 = vmatprep.subr.mxu0 0.0
    %365 = vmatpush1.msra.mxu0 %v285
    %366 = vmatprep.subr.mxu0 0.0
    %367 = vmatpush2.msra.mxu0 0.0
    %368 = vmatprep.subr.mxu0 0.0
    %369 = vmatpush2.msra.mxu0 0.0
    %370 = vmatprep.subr.mxu0 0.0
    %371 = vmatpush2.msra.mxu0 0.0
    %372 = vmatprep.subr.mxu0 0.0
    %373 = vmatpush2.msra.mxu0 0.0
    %374 = vmatprep.subr.mxu0 0.0
    %375 = vmatpush2.msra.mxu0 0.0
    %376 = vmatprep.subr.mxu0 0.0
    %377 = vmatpush2.msra.mxu0 0.0
    %378 = vmatprep.subr.mxu0 0.0
    %379 = vmatpush2.msra.mxu0 0.0
    %380 = vmatprep.subr.mxu0 0.0
    %381 = vmatpush2.msra.mxu0 0.0
    %382 = vmatprep.subr.mxu0 0.0
    %383 = vmatpush2.msra.mxu0 0.0
    %384 = vmatprep.subr.mxu0 0.0
    %385 = vmatpush2.msra.mxu0 0.0
    %386 = vmatprep.subr.mxu0 0.0
    %387 = vmatpush2.msra.mxu0 0.0
    %388 = vmatprep.subr.mxu0 0.0
    %389 = vmatpush2.msra.mxu0 0.0
    %390 = vmatprep.subr.mxu0 0.0
    %391 = vmatpush2.msra.mxu0 0.0
    %392 = vmatprep.subr.mxu0 0.0
    %393 = vmatpush2.msra.mxu0 0.0
    %394 = vmatprep.subr.mxu0 0.0
    %395 = vmatpush2.msra.mxu0 0.0
    %396 = vmatprep.subr.mxu0 0.0
    %397 = vmatpush2.msra.mxu0 0.0
    %398 = vmatprep.mubr.f32.mxu0 0.0
    %399 = vmatmul.mubr.f32.gmra.mxu0 %v323
    %v400 = vpop.f32.mrf.mxu0
    %v401 = vadd.f32 %v304, %v400
    %v402 = vpop.f32.mrf.mxu0
    %403 = vmatprep.mubr.f32.mxu0 0.0
    %404 = vmatmul.mubr.f32.gmra.mxu0 %v326
    %v405 = vpop.f32.mrf.mxu0
    %v406 = vadd.f32 %v309, %v405
    %v407 = vpop.f32.mrf.mxu0
    %408 = vmatprep.mubr.f32.mxu0 0.0
    %409 = vmatmul.mubr.f32.gmra.mxu0 %v329
    %v410 = vpop.f32.mrf.mxu0
    %v411 = vadd.f32 %v314, %v410
    %v412 = vpop.f32.mrf.mxu0
    %413 = vmatprep.mubr.f32.mxu0 0.0
    %414 = vmatmul.mubr.f32.gmra.mxu0 %v332
    %v415 = vpop.f32.mrf.mxu0
    %v416 = vadd.f32 %v319, %v415
    %v417 = vpop.f32.mrf.mxu0
    %418 = vdwg.mxu0
    %v419 = vmax.f32 %v401, 0.0
    %v420 = vmax.f32 %v406, 0.0
    %v421 = vmax.f32 %v411, 0.0
    %v422 = vmax.f32 %v416, 0.0
    %v423 = vld [vmem:[%s5] sm:$0xff]
    %v424 = vld [vmem:[%s5 + $0x8] sm:$0xff]
    %v425 = vld [vmem:[%s6] sm:$0xff]
    %v426 = vld [vmem:[%s6 + $0x8] sm:$0xff]
    %428 = vset.pattern.permute.xlu0 0
    %429 = vperm.xlu0 %428, %v425
    %v430 = vpop.permute.xlu0 %429
    %433 = vset.pattern.permute.xlu0 0
    %434 = vperm.xlu0 %433, %v426
    %v435 = vpop.permute.xlu0 %434
    %vm437 = vcmask 261120
    %v439 = vsel %vm437, %v423, 0
    %v442 = vsel %vm437, %v424, 0
    %444 = vmatprep.subr.mxu0 0.0
    %445 = vmatpush1.msra.mxu0 0.0
    %446 = vmatprep.subr.mxu0 0.0
    %447 = vmatpush1.msra.mxu0 0.0
    %448 = vmatprep.subr.mxu0 0.0
    %449 = vmatpush1.msra.mxu0 0.0
    %450 = vmatprep.subr.mxu0 0.0
    %451 = vmatpush1.msra.mxu0 0.0
    %452 = vmatprep.subr.mxu0 0.0
    %453 = vmatpush1.msra.mxu0 0.0
    %454 = vmatprep.subr.mxu0 0.0
    %455 = vmatpush1.msra.mxu0 0.0
    %456 = vmatprep.subr.mxu0 0.0
    %457 = vmatpush1.msra.mxu0 0.0
    %458 = vmatprep.subr.mxu0 0.0
    %459 = vmatpush1.msra.mxu0 0.0
    %460 = vmatprep.subr.mxu0 0.0
    %461 = vmatpush1.msra.mxu0 0.0
    %462 = vmatprep.subr.mxu0 0.0
    %463 = vmatpush1.msra.mxu0 0.0
    %464 = vmatprep.subr.mxu0 0.0
    %465 = vmatpush1.msra.mxu0 0.0
    %466 = vmatprep.subr.mxu0 0.0
    %467 = vmatpush1.msra.mxu0 0.0
    %468 = vmatprep.subr.mxu0 0.0
    %469 = vmatpush1.msra.mxu0 %v422
    %470 = vmatprep.subr.mxu0 0.0
    %471 = vmatpush1.msra.mxu0 %v421
    %472 = vmatprep.subr.mxu0 0.0
    %473 = vmatpush1.msra.mxu0 %v420
    %474 = vmatprep.subr.mxu0 0.0
    %475 = vmatpush1.msra.mxu0 %v419
    %476 = vmatprep.subr.mxu0 0.0
    %477 = vmatpush2.msra.mxu0 0.0
    %478 = vmatprep.subr.mxu0 0.0
    %479 = vmatpush2.msra.mxu0 0.0
    %480 = vmatprep.subr.mxu0 0.0
    %481 = vmatpush2.msra.mxu0 0.0
    %482 = vmatprep.subr.mxu0 0.0
    %483 = vmatpush2.msra.mxu0 0.0
    %484 = vmatprep.subr.mxu0 0.0
    %485 = vmatpush2.msra.mxu0 0.0
    %486 = vmatprep.subr.mxu0 0.0
    %487 = vmatpush2.msra.mxu0 0.0
    %488 = vmatprep.subr.mxu0 0.0
    %489 = vmatpush2.msra.mxu0 0.0
    %490 = vmatprep.subr.mxu0 0.0
    %491 = vmatpush2.msra.mxu0 0.0
    %492 = vmatprep.subr.mxu0 0.0
    %493 = vmatpush2.msra.mxu0 0.0
    %494 = vmatprep.subr.mxu0 0.0
    %495 = vmatpush2.msra.mxu0 0.0
    %496 = vmatprep.subr.mxu0 0.0
    %497 = vmatpush2.msra.mxu0 0.0
    %498 = vmatprep.subr.mxu0 0.0
    %499 = vmatpush2.msra.mxu0 0.0
    %500 = vmatprep.subr.mxu0 0.0
    %501 = vmatpush2.msra.mxu0 0.0
    %502 = vmatprep.subr.mxu0 0.0
    %503 = vmatpush2.msra.mxu0 0.0
    %504 = vmatprep.subr.mxu0 0.0
    %505 = vmatpush2.msra.mxu0 0.0
    %506 = vmatprep.subr.mxu0 0.0
    %507 = vmatpush2.msra.mxu0 0.0
    %508 = vmatprep.mubr.f32.mxu0 0.0
    %509 = vmatmul.mubr.f32.gmra.mxu0 %v439
    %v510 = vpop.f32.mrf.mxu0
    %v511 = vadd.f32 %v430, %v510
    %v512 = vpop.f32.mrf.mxu0
    %513 = vmatprep.mubr.f32.mxu0 0.0
    %514 = vmatmul.mubr.f32.gmra.mxu0 %v442
    %v515 = vpop.f32.mrf.mxu0
    %v516 = vadd.f32 %v435, %v515
    %v517 = vpop.f32.mrf.mxu0
    %518 = vdwg.mxu0
    %v519 = vmax.f32 %v511, 0.0
    %v520 = vmax.f32 %v516, 0.0
    %v521 = vld [vmem:[%s7] sm:$0xff]
    %v522 = vld [vmem:[%s7 + $0x8] sm:$0xff]
    %524 = vset.pattern.permute.xlu0 0
    %525 = vperm.xlu0 %524, %v521
    %v526 = vpop.permute.xlu0 %525
    %529 = vset.pattern.permute.xlu0 0
    %530 = vperm.xlu0 %529, %v522
    %v531 = vpop.permute.xlu0 %530
    %v533 = vmul.f32 %v519, %v526
    %v534 = vmul.f32 %v520, %v531
    %v535 = vadd.f32 %v533, %v534
    %v536 = vrot.slane %v535, 4
    %v537 = vadd.f32 %v535, %v536
    %v538 = vrot.slane %v537, 2
    %v539 = vadd.f32 %v537, %v538
    %v540 = vrot.slane %v539, 1
    %v541 = vadd.f32 %v539, %v540
    %v542 = vld [vmem:[#allocation2] sm:$0x1]
    %544 = vset.pattern.permute.xlu0 0
    %545 = vperm.xlu0 %544, %v542
    %v546 = vpop.permute.xlu0 %545
    %v548 = vlaneseq
    %v549 = vshrl.u32 %v548, 7
    %v550 = vsub.s32 0, %v549
    %v551 = vrot.slane %v546, %v550
    %v552 = vadd.f32 %v541, %v551
    %553 = vst [vmem:[#allocation3] sm:$0x1] %v552
    // Predicated region
    $region38: #{tpu_custom_call.1} parent=1 // pred_check
      _
    $region39: #{tpu_custom_call.1} parent=1 // pred_check_branch
      %555 = sbr.rel (0) target = $region41
    $region40: #{tpu_custom_call.1} parent=1 // pred_region
      %s557 = ssub.s32 16, 16
      %558 = vsyncadd [#allocation4], %s557
      %s560 = sshll.u32 [#allocation3], 4
      %s561 = int_to_ptr.vmem [resolvable:$true] %s560
      %563 = dma.vmem_to_hbm [thread:$0]  %s561, 16, %s9, [#allocation4]
    $region41: #{tpu_custom_call.1} parent=1 // pred_fallthru
      _
    // Predicated region
    $region42: #{tpu_custom_call.1} parent=1 // pred_check
      _
    $region43: #{tpu_custom_call.1} parent=1 // pred_check_branch
      %565 = sbr.rel (0) target = $region45
    $region44: #{tpu_custom_call.1} parent=1 // pred_region
      %566 = dma.done [#allocation4], 16
    $region45: #{tpu_custom_call.1} parent=1 // pred_fallthru
      _
    %567 = vsyncpa [#allocation4], 1

</llo_original>
